<compile_context>
chip_gen: v5e
topology: v5e:2x2
jax: 0.10.0
libtpu: 0.0.40
codegen_flags: <defaults>
</compile_context>

<pallas_src>
import functools

import jax
import jax.numpy as jnp
from jax.experimental import pallas as pl
from jax.experimental.pallas import tpu as pltpu

LANES = 128


def _round_up(n, m):
    return ((n + m - 1) // m) * m


# ----------------------------------------------------------------------------
# Packed parameter slab layout (one lane-dense f32 [rows, 128] array).
# ----------------------------------------------------------------------------
def _param_layout(input_dim, latent_dim):
    """Row layout of the packed parameter slab (each section padded to 8 rows)."""
    sections = [
        ("ew1", (input_dim, 16)),
        ("eb1", (1, 16)),
        ("ew2", (16, 8)),
        ("eb2", (1, 8)),
        ("ewmv", (8, LANES)),     # fused mu|logvar head, placed at output lanes
        ("ebmv", (1, LANES)),
        ("dw1", (latent_dim, 8)),
        ("db1", (1, 8)),
        ("dw2", (8, 16)),
        ("db2", (1, 16)),
        ("dw3", (16, LANES)),     # decoder fc3, placed at output lanes 0:input_dim
        ("db3", (1, LANES)),
    ]
    offsets = {}
    row = 0
    for name, (r, c) in sections:
        offsets[name] = (row, r, c)
        row += _round_up(r, 8)
    return offsets, _round_up(row, 8)


def pack_params(params, input_dim, latent_dim):
    """Pack all weights/biases once into a single lane-dense [rows, 128] f32 slab.

    The mu|logvar head and fc3 outputs are pre-placed at the lanes they occupy
    in the packed kernel output [recon | mu | logvar | 0-pad], so the kernel
    never needs a cross-lane concatenate.
    """
    assert input_dim + 2 * latent_dim <= LANES, "packed output must fit in 128 lanes"
    offsets, total_rows = _param_layout(input_dim, latent_dim)

    # Fused + lane-placed mu|logvar head.
    ewmv = jnp.zeros((8, LANES), jnp.float32)
    ewmv = ewmv.at[:, input_dim:input_dim + latent_dim].set(params["ewm"])
    ewmv = ewmv.at[:, input_dim + latent_dim:input_dim + 2 * latent_dim].set(params["ewv"])
    ebmv = jnp.zeros((1, LANES), jnp.float32)
    ebmv = ebmv.at[:, input_dim:input_dim + latent_dim].set(params["ebm"])
    ebmv = ebmv.at[:, input_dim + latent_dim:input_dim + 2 * latent_dim].set(params["ebv"])

    # Lane-placed decoder output layer (recon at lanes 0:input_dim).
    dw3 = jnp.zeros((16, LANES), jnp.float32).at[:, 0:input_dim].set(params["dw3"])
    db3 = jnp.zeros((1, LANES), jnp.float32).at[:, 0:input_dim].set(params["db3"])

    placed = {
        "ew1": params["ew1"], "eb1": params["eb1"],
        "ew2": params["ew2"], "eb2": params["eb2"],
        "ewmv": ewmv, "ebmv": ebmv,
        "dw1": params["dw1"], "db1": params["db1"],
        "dw2": params["dw2"], "db2": params["db2"],
        "dw3": dw3, "db3": db3,
    }

    slab = jnp.zeros((total_rows, LANES), jnp.float32)
    for name, (r0, r, _c) in offsets.items():
        arr = jnp.asarray(placed[name], jnp.float32).reshape(r, -1)
        slab = slab.at[r0:r0 + r, 0:arr.shape[1]].set(arr)
    return slab


# ----------------------------------------------------------------------------
# Kernel
# ----------------------------------------------------------------------------
def _vae_kernel(x_ref, eps_ref, p_ref, out_ref, *, offsets, input_dim, latent_dim):
    def get(name):
        r0, r, c = offsets[name]
        return p_ref[r0:r0 + r, 0:c]

    x = x_ref[...]        # [tile_b, input_dim]
    eps = eps_ref[...]    # [tile_b, latent_dim]

    # --- Encoder ---
    h = jnp.dot(x, get("ew1"), preferred_element_type=jnp.float32) + get("eb1")
    h = jnp.maximum(h, 0.0)
    h = jnp.dot(h, get("ew2"), preferred_element_type=jnp.float32) + get("eb2")
    h = jnp.maximum(h, 0.0)

    # --- Fused mu|logvar head, already placed at output lanes [input_dim, input_dim+2L) ---
    mlv = jnp.dot(h, get("ewmv"), preferred_element_type=jnp.float32) + get("ebmv")
    mu = mlv[:, input_dim:input_dim + latent_dim]
    logvar = mlv[:, input_dim + latent_dim:input_dim + 2 * latent_dim]

    # --- Reparameterize: z = mu + eps * exp(0.5 * logvar) ---
    z = mu + eps * jnp.exp(0.5 * logvar)

    # --- Decoder (fc3 output placed at lanes 0:input_dim of the 128-wide slab) ---
    d = jnp.dot(z, get("dw1"), preferred_element_type=jnp.float32) + get("db1")
    d = jnp.maximum(d, 0.0)
    d = jnp.dot(d, get("dw2"), preferred_element_type=jnp.float32) + get("db2")
    d = jnp.maximum(d, 0.0)
    recon = jnp.dot(d, get("dw3"), preferred_element_type=jnp.float32) + get("db3")

    # --- Single lane-dense packed output: [recon | mu | logvar | 0-pad] ---
    # recon is zero on lanes >= input_dim, mlv is zero outside [input_dim, input_dim+2L),
    # so a plain add gives the packed slab with one unmasked full-width store.
    out_ref[...] = recon + mlv


# ----------------------------------------------------------------------------
# Tiling heuristics
# ----------------------------------------------------------------------------
def _choose_tiling(B, batch_tile):
    """Pick (tile_b, b_pad): big (~>=1 MiB) balanced tiles, low over-padding,
    and >= 2 (even) grid steps when B >= 16 so v7x's two TCs both get work."""
    target = max(8, min(batch_tile, _round_up(B, 8)))
    n = max(1, -(-B // target))          # grid steps at the target tile
    if B >= 16:
        n = max(n, 2)                    # >= 2 parallel steps for v7x megacore
    if n > 1 and (n % 2):
        n += 1                           # even step count -> balanced across 2 TCs
    tile_b = _round_up(-(-B // n), 8)    # balanced tiles, padding < 8*n rows total
    b_pad = n * tile_b
    return tile_b, b_pad


def _vmem_bytes(tile_b, p_rows, input_dim, latent_dim):
    """Double-buffered VMEM footprint (lane dims pad to 128 in VMEM)."""
    def lanes(c):
        return _round_up(c, LANES)
    per_step = tile_b * (lanes(input_dim) + lanes(latent_dim) + LANES) * 4
    return 2 * per_step + 2 * p_rows * LANES * 4


# ----------------------------------------------------------------------------
# Forward wrapper
# ----------------------------------------------------------------------------
def vae_forward(x, eps, p_slab, *, batch_tile=2048):
    """VAE forward pass in one Pallas kernel.

    x:      [B, input_dim] float32
    eps:    [B, latent_dim] float32 (reparameterization noise)
    p_slab: packed parameter slab from pack_params (built ONCE at init)
    Returns (recon [B, input_dim], mu [B, latent_dim], logvar [B, latent_dim]).
    """
    B, input_dim = x.shape
    latent_dim = eps.shape[1]
    offsets, p_rows = _param_layout(input_dim, latent_dim)
    assert p_slab.shape == (p_rows, LANES)

    tile_b, b_pad = _choose_tiling(B, batch_tile)
    if b_pad != B:
        x = jnp.pad(x, ((0, b_pad - B), (0, 0)))
        eps = jnp.pad(eps, ((0, b_pad - B), (0, 0)))

    flops = 2 * b_pad * (
        input_dim * 16 + 16 * 8 + 8 * LANES          # encoder + fused head
        + latent_dim * 8 + 8 * 16 + 16 * LANES       # decoder
    )
    bytes_accessed = 4 * (
        b_pad * (input_dim + latent_dim) + p_rows * LANES + b_pad * LANES
    )
    cost = pl.CostEstimate(
        flops=flops,
        transcendentals=b_pad * latent_dim,
        bytes_accessed=bytes_accessed,
    )

    cp_kwargs = dict(dimension_semantics=("parallel",))
    vmem_need = _vmem_bytes(tile_b, p_rows, input_dim, latent_dim)
    if vmem_need > (12 << 20):           # only needed for very large tiles (v5e default 16 MiB)
        cp_kwargs["vmem_limit_bytes"] = min(vmem_need + (4 << 20), 60 << 20)

    kernel = functools.partial(
        _vae_kernel, offsets=offsets, input_dim=input_dim, latent_dim=latent_dim
    )

    packed_out = pl.pallas_call(
        kernel,
        out_shape=jax.ShapeDtypeStruct((b_pad, LANES), jnp.float32),
        grid_spec=pltpu.PrefetchScalarGridSpec(
            num_scalar_prefetch=0,
            grid=(b_pad // tile_b,),
            in_specs=[
                pl.BlockSpec((tile_b, input_dim), lambda i: (i, 0)),   # x (full last dim)
                pl.BlockSpec((tile_b, latent_dim), lambda i: (i, 0)),  # eps (full last dim)
                pl.BlockSpec((p_rows, LANES), lambda i: (0, 0)),       # weights resident
            ],
            out_specs=pl.BlockSpec((tile_b, LANES), lambda i: (i, 0)),
        ),
        compiler_params=pltpu.CompilerParams(**cp_kwargs),
        cost_estimate=cost,
    )(x, eps, p_slab)

    recon = packed_out[:B, 0:input_dim]
    mu = packed_out[:B, input_dim:input_dim + latent_dim]
    logvar = packed_out[:B, input_dim + latent_dim:input_dim + 2 * latent_dim]
    return recon, mu, logvar


# ----------------------------------------------------------------------------
# Init + pure-JAX reference
# ----------------------------------------------------------------------------
def init_params(key, input_dim, latent_dim):
    """Deterministic parameter init mimicking nn.Linear's U(-1/sqrt(fan_in), +...)."""
    def linear(k, fan_in, fan_out):
        kw, kb = jax.random.split(k)
        bound = 1.0 / jnp.sqrt(jnp.float32(fan_in))
        w = jax.random.uniform(kw, (fan_in, fan_out), jnp.float32, -bound, bound)
        b = jax.random.uniform(kb, (1, fan_out), jnp.float32, -bound, bound)
        return w, b

    keys = jax.random.split(key, 7)
    ew1, eb1 = linear(keys[0], input_dim, 16)
    ew2, eb2 = linear(keys[1], 16, 8)
    ewm, ebm = linear(keys[2], 8, latent_dim)
    ewv, ebv = linear(keys[3], 8, latent_dim)
    dw1, db1 = linear(keys[4], latent_dim, 8)
    dw2, db2 = linear(keys[5], 8, 16)
    dw3, db3 = linear(keys[6], 16, input_dim)
    return dict(
        ew1=ew1, eb1=eb1, ew2=ew2, eb2=eb2,
        ewm=ewm, ebm=ebm, ewv=ewv, ebv=ebv,
        dw1=dw1, db1=db1, dw2=dw2, db2=db2, dw3=dw3, db3=db3,
    )


def vae_reference(x, eps, p):
    """Pure-JAX reference for correctness checking."""
    h = jnp.maximum(x @ p["ew1"] + p["eb1"], 0.0)
    h = jnp.maximum(h @ p["ew2"] + p["eb2"], 0.0)
    mu = h @ p["ewm"] + p["ebm"]
    logvar = h @ p["ewv"] + p["ebv"]
    z = mu + eps * jnp.exp(0.5 * logvar)
    d = jnp.maximum(z @ p["dw1"] + p["db1"], 0.0)
    d = jnp.maximum(d @ p["dw2"] + p["db2"], 0.0)
    recon = d @ p["dw3"] + p["db3"]
    return recon, mu, logvar


if __name__ == "__main__":
    key = jax.random.PRNGKey(0)
    k_x, k_eps, k_p = jax.random.split(key, 3)

    B, INPUT_DIM, LATENT_DIM = 8, 32, 4

    x = jax.random.normal(k_x, (B, INPUT_DIM), jnp.float32)
    eps = jax.random.normal(k_eps, (B, LATENT_DIM), jnp.float32)
    params = init_params(k_p, INPUT_DIM, LATENT_DIM)

    # Pack parameters ONCE (hoisted out of the per-forward path).
    p_slab = jax.block_until_ready(pack_params(params, INPUT_DIM, LATENT_DIM))

    fwd = jax.jit(vae_forward)
    recon, mu, logvar = fwd(x, eps, p_slab)
    jax.block_until_ready((recon, mu, logvar))

    r_ref, m_ref, lv_ref = vae_reference(x, eps, params)
    assert recon.shape == (B, INPUT_DIM)
    assert mu.shape == (B, LATENT_DIM) and logvar.shape == (B, LATENT_DIM)
    assert jnp.allclose(recon, r_ref, atol=1e-5)
    assert jnp.allclose(mu, m_ref, atol=1e-5)
    assert jnp.allclose(logvar, lv_ref, atol=1e-5)

    print("KERNEL_OK")
</pallas_src>

<mosaic_0001>
module attributes {stable_mosaic.version = 11 : i64} {
  func.func @_vae_kernel(%arg0: i32, %arg1: memref<8x32xf32, #tpu.memory_space<vmem>>, %arg2: memref<8x4xf32, #tpu.memory_space<vmem>>, %arg3: memref<136x128xf32, #tpu.memory_space<vmem>>, %arg4: memref<8x128xf32, #tpu.memory_space<vmem>>) attributes {dimension_semantics = [#tpu.dimension_semantics<parallel>], iteration_bounds = array<i64: 1>, scalar_prefetch = 0 : i64, scratch_operands = 0 : i64, tpu.core_type = #tpu.core_type<tc>, window_params = [{transform_indices = @transform_0, window_bounds = array<i64: 8, 32>}, {transform_indices = @transform_1, window_bounds = array<i64: 8, 4>}, {pipeline_mode = #tpu.pipeline_mode<synchronous>, transform_indices = @transform_2, window_bounds = array<i64: 136, 128>}, {transform_indices = @transform_3, window_bounds = array<i64: 8, 128>}]} {
    %c0 = arith.constant 0 : index
    %c0_0 = arith.constant 0 : index
    %0 = vector.load %arg1[%c0, %c0_0] : memref<8x32xf32, #tpu.memory_space<vmem>>, vector<8x32xf32>
    %c0_1 = arith.constant 0 : index
    %c0_2 = arith.constant 0 : index
    %1 = vector.load %arg2[%c0_1, %c0_2] : memref<8x4xf32, #tpu.memory_space<vmem>>, vector<8x4xf32>
    %c0_3 = arith.constant 0 : index
    %c0_4 = arith.constant 0 : index
    %2 = vector.load %arg3[%c0_3, %c0_4] : memref<136x128xf32, #tpu.memory_space<vmem>>, vector<32x16xf32>
    %cst = arith.constant dense<0.000000e+00> : vector<8x16xf32>
    %3 = tpu.matmul %0, %2, %cst {dimension_numbers = #tpu.dot_dimension_numbers<[1], [0], [0], [1], [0, 0, 1, 1], [], []>} : vector<8x32xf32>, vector<32x16xf32>, vector<8x16xf32> -> vector<8x16xf32>
    %c32 = arith.constant 32 : index
    %c0_5 = arith.constant 0 : index
    %4 = vector.load %arg3[%c32, %c0_5] : memref<136x128xf32, #tpu.memory_space<vmem>>, vector<1x16xf32>
    %5 = vector.broadcast %4 : vector<1x16xf32> to vector<8x16xf32>
    %6 = arith.addf %3, %5 : vector<8x16xf32>
    %cst_6 = arith.constant 0.000000e+00 : f32
    %7 = vector.broadcast %cst_6 : f32 to vector<8x16xf32>
    %8 = arith.maximumf %6, %7 : vector<8x16xf32>
    %c40 = arith.constant 40 : index
    %c0_7 = arith.constant 0 : index
    %9 = vector.load %arg3[%c40, %c0_7] : memref<136x128xf32, #tpu.memory_space<vmem>>, vector<16x8xf32>
    %cst_8 = arith.constant dense<0.000000e+00> : vector<8x8xf32>
    %10 = tpu.matmul %8, %9, %cst_8 {dimension_numbers = #tpu.dot_dimension_numbers<[1], [0], [0], [1], [0, 0, 1, 1], [], []>} : vector<8x16xf32>, vector<16x8xf32>, vector<8x8xf32> -> vector<8x8xf32>
    %c56 = arith.constant 56 : index
    %c0_9 = arith.constant 0 : index
    %11 = vector.load %arg3[%c56, %c0_9] : memref<136x128xf32, #tpu.memory_space<vmem>>, vector<1x8xf32>
    %12 = vector.broadcast %11 : vector<1x8xf32> to vector<8x8xf32>
    %13 = arith.addf %10, %12 : vector<8x8xf32>
    %cst_10 = arith.constant 0.000000e+00 : f32
    %14 = vector.broadcast %cst_10 : f32 to vector<8x8xf32>
    %15 = arith.maximumf %13, %14 : vector<8x8xf32>
    %c64 = arith.constant 64 : index
    %c0_11 = arith.constant 0 : index
    %16 = vector.load %arg3[%c64, %c0_11] : memref<136x128xf32, #tpu.memory_space<vmem>>, vector<8x128xf32>
    %cst_12 = arith.constant dense<0.000000e+00> : vector<8x128xf32>
    %17 = tpu.matmul %15, %16, %cst_12 {dimension_numbers = #tpu.dot_dimension_numbers<[1], [0], [0], [1], [0, 0, 1, 1], [], []>} : vector<8x8xf32>, vector<8x128xf32>, vector<8x128xf32> -> vector<8x128xf32>
    %c72 = arith.constant 72 : index
    %c0_13 = arith.constant 0 : index
    %18 = vector.load %arg3[%c72, %c0_13] : memref<136x128xf32, #tpu.memory_space<vmem>>, vector<1x128xf32>
    %19 = vector.broadcast %18 : vector<1x128xf32> to vector<8x128xf32>
    %20 = arith.addf %17, %19 : vector<8x128xf32>
    %21 = vector.extract_strided_slice %20 {offsets = [0, 32], sizes = [8, 4], strides = [1, 1]} : vector<8x128xf32> to vector<8x4xf32>
    %22 = vector.extract_strided_slice %20 {offsets = [0, 36], sizes = [8, 4], strides = [1, 1]} : vector<8x128xf32> to vector<8x4xf32>
    %cst_14 = arith.constant 5.000000e-01 : f32
    %23 = vector.broadcast %cst_14 : f32 to vector<8x4xf32>
    %24 = arith.mulf %23, %22 : vector<8x4xf32>
    %25 = math.exp %24 : vector<8x4xf32>
    %26 = arith.mulf %1, %25 : vector<8x4xf32>
    %27 = arith.addf %21, %26 : vector<8x4xf32>
    %c80 = arith.constant 80 : index
    %c0_15 = arith.constant 0 : index
    %28 = vector.load %arg3[%c80, %c0_15] : memref<136x128xf32, #tpu.memory_space<vmem>>, vector<4x8xf32>
    %cst_16 = arith.constant dense<0.000000e+00> : vector<8x8xf32>
    %29 = tpu.matmul %27, %28, %cst_16 {dimension_numbers = #tpu.dot_dimension_numbers<[1], [0], [0], [1], [0, 0, 1, 1], [], []>} : vector<8x4xf32>, vector<4x8xf32>, vector<8x8xf32> -> vector<8x8xf32>
    %c88 = arith.constant 88 : index
    %c0_17 = arith.constant 0 : index
    %30 = vector.load %arg3[%c88, %c0_17] : memref<136x128xf32, #tpu.memory_space<vmem>>, vector<1x8xf32>
    %31 = vector.broadcast %30 : vector<1x8xf32> to vector<8x8xf32>
    %32 = arith.addf %29, %31 : vector<8x8xf32>
    %cst_18 = arith.constant 0.000000e+00 : f32
    %33 = vector.broadcast %cst_18 : f32 to vector<8x8xf32>
    %34 = arith.maximumf %32, %33 : vector<8x8xf32>
    %c96 = arith.constant 96 : index
    %c0_19 = arith.constant 0 : index
    %35 = vector.load %arg3[%c96, %c0_19] : memref<136x128xf32, #tpu.memory_space<vmem>>, vector<8x16xf32>
    %cst_20 = arith.constant dense<0.000000e+00> : vector<8x16xf32>
    %36 = tpu.matmul %34, %35, %cst_20 {dimension_numbers = #tpu.dot_dimension_numbers<[1], [0], [0], [1], [0, 0, 1, 1], [], []>} : vector<8x8xf32>, vector<8x16xf32>, vector<8x16xf32> -> vector<8x16xf32>
    %c104 = arith.constant 104 : index
    %c0_21 = arith.constant 0 : index
    %37 = vector.load %arg3[%c104, %c0_21] : memref<136x128xf32, #tpu.memory_space<vmem>>, vector<1x16xf32>
    %38 = vector.broadcast %37 : vector<1x16xf32> to vector<8x16xf32>
    %39 = arith.addf %36, %38 : vector<8x16xf32>
    %cst_22 = arith.constant 0.000000e+00 : f32
    %40 = vector.broadcast %cst_22 : f32 to vector<8x16xf32>
    %41 = arith.maximumf %39, %40 : vector<8x16xf32>
    %c112 = arith.constant 112 : index
    %c0_23 = arith.constant 0 : index
    %42 = vector.load %arg3[%c112, %c0_23] : memref<136x128xf32, #tpu.memory_space<vmem>>, vector<16x128xf32>
    %cst_24 = arith.constant dense<0.000000e+00> : vector<8x128xf32>
    %43 = tpu.matmul %41, %42, %cst_24 {dimension_numbers = #tpu.dot_dimension_numbers<[1], [0], [0], [1], [0, 0, 1, 1], [], []>} : vector<8x16xf32>, vector<16x128xf32>, vector<8x128xf32> -> vector<8x128xf32>
    %c128 = arith.constant 128 : index
    %c0_25 = arith.constant 0 : index
    %44 = vector.load %arg3[%c128, %c0_25] : memref<136x128xf32, #tpu.memory_space<vmem>>, vector<1x128xf32>
    %45 = vector.broadcast %44 : vector<1x128xf32> to vector<8x128xf32>
    %46 = arith.addf %43, %45 : vector<8x128xf32>
    %47 = arith.addf %46, %20 : vector<8x128xf32>
    %c0_26 = arith.constant 0 : index
    %c0_27 = arith.constant 0 : index
    %48 = vector.load %arg4[%c0_26, %c0_27] : memref<8x128xf32, #tpu.memory_space<vmem>>, vector<8x128xf32>
    tpu.vector_store %arg4[%c0_26, %c0_27], %47 {strides = array<i32>} : memref<8x128xf32, #tpu.memory_space<vmem>>, vector<8x128xf32>,
    return
  }
  func.func @transform_0(%arg0: i32) -> (i32, i32) {
    %c0_i32 = arith.constant 0 : i32
    %c0_i32_0 = arith.constant 0 : i32
    return %arg0, %c0_i32 : i32, i32
  }
  func.func @transform_1(%arg0: i32) -> (i32, i32) {
    %c0_i32 = arith.constant 0 : i32
    %c0_i32_0 = arith.constant 0 : i32
    return %arg0, %c0_i32 : i32, i32
  }
  func.func @transform_2(%arg0: i32) -> (i32, i32) {
    %c0_i32 = arith.constant 0 : i32
    %c0_i32_0 = arith.constant 0 : i32
    %c0_i32_1 = arith.constant 0 : i32
    return %c0_i32, %c0_i32_0 : i32, i32
  }
  func.func @transform_3(%arg0: i32) -> (i32, i32) {
    %c0_i32 = arith.constant 0 : i32
    %c0_i32_0 = arith.constant 0 : i32
    return %arg0, %c0_i32 : i32, i32
  }
}

</mosaic_0001>

<llo_original>
// kernel: vae_forward.1
$region0: #{vae_forward.1}
  #allocation0 [shape = 'u32[]', space=smem, size = 0x4, offset = 0x4, fixed_abs, tag = 'smem constant byte address 0x4 - core index']
  #allocation1 [shape = 'u32[72,128]{1,0:T(1,128)}', space=vmem, size = 0x9000, scoped, tag = 'internal scratch']
  %s0 = inlined_call_operand.vmem [shape: f32[8,32], index: 0, kind: input, shape index: {}]
  %s1 = inlined_call_operand.vmem [shape: f32[8,4], index: 1, kind: input, shape index: {}]
  %s2 = inlined_call_operand.hbm [shape: f32[136,128], index: 2, kind: input, shape index: {}]
  %s3 = inlined_call_operand.vmem [shape: f32[8,128], index: 3, kind: output, shape index: {}]
  %s4 = sld [smem:[#allocation0]]
  $region26: #{vae_forward.1} parent=0
    _
  %s6 = ssub.s32 1, %s4
  %s7 = scalar_select 0, %s6, %s4
  $region1: #{vae_forward.1} parent=0
    #allocation2 [shape = 'u8[69632]{0}', space=vmem, size = 0x11000, scoped, tag = 'input window, operand 2, single buffered']
    #allocation3 [shape = 's32[1]{0}', space=sflag, size = 0x4, scoped, tag = 'scoped memory for vae_forward.1']
    %8 = vsyncpa [#allocation3], 0
    // Predicated region
    $region2: #{vae_forward.1} parent=1 // pred_check
      _
    $region3: #{vae_forward.1} parent=1 // pred_check_branch
      %10 = sbr.rel (0) target = $region5
    $region4: #{vae_forward.1} parent=1 // pred_region
      _
    $region5: #{vae_forward.1} parent=1 // pred_fallthru
      _
    // Predicated region
    $region6: #{vae_forward.1} parent=1 // pred_check
      _
    $region7: #{vae_forward.1} parent=1 // pred_check_branch
      %12 = sbr.rel (0) target = $region9
    $region8: #{vae_forward.1} parent=1 // pred_region
      _
    $region9: #{vae_forward.1} parent=1 // pred_fallthru
      _
    // Predicated region
    $region10: #{vae_forward.1} parent=1 // pred_check
      _
    $region11: #{vae_forward.1} parent=1 // pred_check_branch
      %14 = sbr.rel (0) target = $region13
    $region12: #{vae_forward.1} parent=1 // pred_region
      %16 = vsyncadd [#allocation3], 0
      %s17 = sshll.u32 %s2, 4
      %s18 = int_to_ptr.hbm [resolvable:$true] %s17
      %s19 = sshll.u32 [#allocation2], 4
      %s20 = int_to_ptr.vmem [resolvable:$true] %s19
      %25 = dma.hbm_to_vmem [thread:$0]  %s18, 2176, %s20, [#allocation3], 128, 128, 8
    $region13: #{vae_forward.1} parent=1 // pred_fallthru
      _
    // Predicated region
    $region14: #{vae_forward.1} parent=1 // pred_check
      _
    $region15: #{vae_forward.1} parent=1 // pred_check_branch
      %27 = sbr.rel (0) target = $region17
    $region16: #{vae_forward.1} parent=1 // pred_region
      %29 = dma.done [#allocation3], 2176
    $region17: #{vae_forward.1} parent=1 // pred_fallthru
      _
    %v30 = vld [vmem:[%s0] sm:$0xff]
    %v31 = vld [vmem:[%s1] sm:$0xff]
    %v32 = vld [vmem:[#allocation2] sm:$0xff]
    %v33 = vld [vmem:[#allocation2 + $0x8] sm:$0xff]
    %v34 = vld [vmem:[#allocation2 + $0x10] sm:$0xff]
    %v35 = vld [vmem:[#allocation2 + $0x18] sm:$0xff]
    %v36 = vld [vmem:[#allocation2 + $0x20] sm:$0x1]
    %v37 = vperm.slane %v36, 0
    %vm38 = vcmask 261120
    %v40 = vsel %vm38, %v30, 0
    %42 = vmatpush.msra.mxu0 0.0
    %43 = vmatpush.msra.mxu0 0.0
    %44 = vmatpush.msra.mxu0 0.0
    %45 = vmatpush.msra.mxu0 0.0
    %46 = vmatpush.msra.mxu0 0.0
    %47 = vmatpush.msra.mxu0 0.0
    %48 = vmatpush.msra.mxu0 0.0
    %49 = vmatpush.msra.mxu0 0.0
    %50 = vmatpush.msra.mxu0 0.0
    %51 = vmatpush.msra.mxu0 0.0
    %52 = vmatpush.msra.mxu0 0.0
    %53 = vmatpush.msra.mxu0 0.0
    %54 = vmatpush.msra.mxu0 %v35
    %55 = vmatpush.msra.mxu0 %v34
    %56 = vmatpush.msra.mxu0 %v33
    %57 = vmatpush.msra.mxu0 %v32
    %58 = vmatmul.f32.gmra.mxu0 %v40
    %v59 = vpop.f32.mrf.mxu0
    %v60 = vadd.f32 %v37, %v59
    %61 = vdwg.mxu0
    %v62 = vmax.f32 %v60, 0.0
    %v63 = vld [vmem:[#allocation2 + $0x28] sm:$0xff]
    %v64 = vld [vmem:[#allocation2 + $0x30] sm:$0xff]
    %v65 = vld [vmem:[#allocation2 + $0x38] sm:$0x1]
    %v66 = vperm.slane %v65, 0
    %vm67 = vcmask 130048
    %v69 = vsel %vm67, %v62, 0
    %71 = vmatpush.msra.mxu0 0.0
    %72 = vmatpush.msra.mxu0 0.0
    %73 = vmatpush.msra.mxu0 0.0
    %74 = vmatpush.msra.mxu0 0.0
    %75 = vmatpush.msra.mxu0 0.0
    %76 = vmatpush.msra.mxu0 0.0
    %77 = vmatpush.msra.mxu0 0.0
    %78 = vmatpush.msra.mxu0 0.0
    %79 = vmatpush.msra.mxu0 0.0
    %80 = vmatpush.msra.mxu0 0.0
    %81 = vmatpush.msra.mxu0 0.0
    %82 = vmatpush.msra.mxu0 0.0
    %83 = vmatpush.msra.mxu0 0.0
    %84 = vmatpush.msra.mxu0 0.0
    %85 = vmatpush.msra.mxu0 %v64
    %86 = vmatpush.msra.mxu0 %v63
    %87 = vmatmul.f32.gmra.mxu0 %v69
    %v88 = vpop.f32.mrf.mxu0
    %v89 = vadd.f32 %v66, %v88
    %90 = vdwg.mxu0
    %v91 = vmax.f32 %v89, 0.0
    %v92 = vld [vmem:[#allocation2 + $0x40] sm:$0xff]
    %v93 = vld [vmem:[#allocation2 + $0x48] sm:$0x1]
    %v94 = vperm.slane %v93, 0
    %vm95 = vcmask 64512
    %v97 = vsel %vm95, %v91, 0
    %99 = vmatpush.msra.mxu0 0.0
    %100 = vmatpush.msra.mxu0 0.0
    %101 = vmatpush.msra.mxu0 0.0
    %102 = vmatpush.msra.mxu0 0.0
    %103 = vmatpush.msra.mxu0 0.0
    %104 = vmatpush.msra.mxu0 0.0
    %105 = vmatpush.msra.mxu0 0.0
    %106 = vmatpush.msra.mxu0 0.0
    %107 = vmatpush.msra.mxu0 0.0
    %108 = vmatpush.msra.mxu0 0.0
    %109 = vmatpush.msra.mxu0 0.0
    %110 = vmatpush.msra.mxu0 0.0
    %111 = vmatpush.msra.mxu0 0.0
    %112 = vmatpush.msra.mxu0 0.0
    %113 = vmatpush.msra.mxu0 0.0
    %114 = vmatpush.msra.mxu0 %v92
    %115 = vmatmul.f32.gmra.mxu0 %v97
    %v116 = vpop.f32.mrf.mxu0
    %v117 = vadd.f32 %v94, %v116
    %118 = vdwg.mxu0
    %v119 = vmul.f32 %v117, 0.5
    %v120 = vmul.f32 %v119, 1.442695
    %v121 = vpow.pop %v120
    %123 = vrot.lane.b32.xlu0 %v121, 92
    %v124 = vpop.permute.xlu0 %123
    %v126 = vmul.f32 %v31, %v124
    %128 = vrot.lane.b32.xlu0 %v126, 32
    %v129 = vpop.permute.xlu0 %128
    %v131 = vadd.f32 %v117, %v129
    %v132 = vld [vmem:[#allocation2 + $0x50] sm:$0xf]
    %v133 = vld [vmem:[#allocation2 + $0x58] sm:$0x1]
    %v134 = vperm.slane %v133, 0
    %136 = vrot.lane.b32.xlu0 %v131, 96
    %v137 = vpop.permute.xlu0 %136
    %vm138 = vcmask 31744
    %v139 = vsel %vm138, %v137, 0
    %vm141 = vcmask 1043456
    %v143 = vsel %vm141, %v132, 0
    %145 = vmatpush.msra.mxu0 0.0
    %146 = vmatpush.msra.mxu0 0.0
    %147 = vmatpush.msra.mxu0 0.0
    %148 = vmatpush.msra.mxu0 0.0
    %149 = vmatpush.msra.mxu0 0.0
    %150 = vmatpush.msra.mxu0 0.0
    %151 = vmatpush.msra.mxu0 0.0
    %152 = vmatpush.msra.mxu0 0.0
    %153 = vmatpush.msra.mxu0 0.0
    %154 = vmatpush.msra.mxu0 0.0
    %155 = vmatpush.msra.mxu0 0.0
    %156 = vmatpush.msra.mxu0 0.0
    %157 = vmatpush.msra.mxu0 0.0
    %158 = vmatpush.msra.mxu0 0.0
    %159 = vmatpush.msra.mxu0 0.0
    %160 = vmatpush.msra.mxu0 %v143
    %161 = vmatmul.f32.gmra.mxu0 %v139
    %v162 = vpop.f32.mrf.mxu0
    %v163 = vadd.f32 %v134, %v162
    %164 = vdwg.mxu0
    %v165 = vmax.f32 %v163, 0.0
    %v166 = vld [vmem:[#allocation2 + $0x60] sm:$0xff]
    %v167 = vld [vmem:[#allocation2 + $0x68] sm:$0x1]
    %v168 = vperm.slane %v167, 0
    %v170 = vsel %vm95, %v165, 0
    %172 = vmatpush.msra.mxu0 0.0
    %173 = vmatpush.msra.mxu0 0.0
    %174 = vmatpush.msra.mxu0 0.0
    %175 = vmatpush.msra.mxu0 0.0
    %176 = vmatpush.msra.mxu0 0.0
    %177 = vmatpush.msra.mxu0 0.0
    %178 = vmatpush.msra.mxu0 0.0
    %179 = vmatpush.msra.mxu0 0.0
    %180 = vmatpush.msra.mxu0 0.0
    %181 = vmatpush.msra.mxu0 0.0
    %182 = vmatpush.msra.mxu0 0.0
    %183 = vmatpush.msra.mxu0 0.0
    %184 = vmatpush.msra.mxu0 0.0
    %185 = vmatpush.msra.mxu0 0.0
    %186 = vmatpush.msra.mxu0 0.0
    %187 = vmatpush.msra.mxu0 %v166
    %188 = vmatmul.f32.gmra.mxu0 %v170
    %v189 = vpop.f32.mrf.mxu0
    %v190 = vadd.f32 %v168, %v189
    %191 = vdwg.mxu0
    %v192 = vmax.f32 %v190, 0.0
    %v193 = vld [vmem:[#allocation2 + $0x70] sm:$0xff]
    %v194 = vld [vmem:[#allocation2 + $0x78] sm:$0xff]
    %v195 = vld [vmem:[#allocation2 + $0x80] sm:$0x1]
    %v196 = vperm.slane %v195, 0
    %v198 = vsel %vm67, %v192, 0
    %200 = vmatpush.msra.mxu0 0.0
    %201 = vmatpush.msra.mxu0 0.0
    %202 = vmatpush.msra.mxu0 0.0
    %203 = vmatpush.msra.mxu0 0.0
    %204 = vmatpush.msra.mxu0 0.0
    %205 = vmatpush.msra.mxu0 0.0
    %206 = vmatpush.msra.mxu0 0.0
    %207 = vmatpush.msra.mxu0 0.0
    %208 = vmatpush.msra.mxu0 0.0
    %209 = vmatpush.msra.mxu0 0.0
    %210 = vmatpush.msra.mxu0 0.0
    %211 = vmatpush.msra.mxu0 0.0
    %212 = vmatpush.msra.mxu0 0.0
    %213 = vmatpush.msra.mxu0 0.0
    %214 = vmatpush.msra.mxu0 %v194
    %215 = vmatpush.msra.mxu0 %v193
    %216 = vmatmul.f32.gmra.mxu0 %v198
    %v217 = vpop.f32.mrf.mxu0
    %v218 = vadd.f32 %v196, %v217
    %219 = vdwg.mxu0
    %v220 = vadd.f32 %v218, %v117
    %221 = vst [vmem:[%s3] sm:$0xff] %v220
    // Predicated region
    $region18: #{vae_forward.1} parent=1 // pred_check
      _
    $region19: #{vae_forward.1} parent=1 // pred_check_branch
      %223 = sbr.rel (0) target = $region21
    $region20: #{vae_forward.1} parent=1 // pred_region
      _
    $region21: #{vae_forward.1} parent=1 // pred_fallthru
      _
    // Predicated region
    $region22: #{vae_forward.1} parent=1 // pred_check
      _
    $region23: #{vae_forward.1} parent=1 // pred_check_branch
      %225 = sbr.rel (0) target = $region25
    $region24: #{vae_forward.1} parent=1 // pred_region
      _
    $region25: #{vae_forward.1} parent=1 // pred_fallthru
      _
    %226 = vsyncpa [#allocation3], 1

</llo_original>
